<compile_context>
chip_gen: v7x
topology: tpu7x:2x2x1
jax: 0.10.0
libtpu: 0.0.40
codegen_flags: <defaults>
</compile_context>

<pallas_src>
import functools

import jax
import jax.numpy as jnp
from jax.experimental import pallas as pl
from jax.experimental.pallas import tpu as pltpu


def _round_up(x, m):
    return (x + m - 1) // m * m


def _cdiv(a, b):
    return -(-a // b)


def _vmem_capacity_bytes():
    """Per-core VMEM capacity; conservative (v7x-like) fallback."""
    try:
        info = pltpu.get_tpu_info()
        cap = int(getattr(info, "vmem_capacity_bytes", 0))
        if cap > 0:
            return cap
    except Exception:
        pass
    return 64 * 2**20


def _sigmoid(a):
    return 1.0 / (1.0 + jnp.exp(-a))


def _fc_block(pooled, w1t, b1, w2t, b2):
    """fc1 -> ReLU -> fc2 -> sigmoid on the pooled (nb, C) f32 activations.

    pooled: (nb, C), w1t: (C, Cr), b1: (1, Cr), w2t: (Cr, C), b2: (1, C).
    """
    nb, C = pooled.shape
    Cr = w1t.shape[1]
    if C * Cr <= 32 * 32:
        # Tiny channel counts (demo sizes): VPU broadcast-mul + sublane reduce
        # avoids a degenerate MXU matmul and its lane<->sublane relayouts.
        h = jnp.sum(pooled[:, :, None] * w1t[None, :, :], axis=1) + b1
        h = jnp.maximum(h, 0.0)
        a = jnp.sum(h[:, :, None] * w2t[None, :, :], axis=1) + b2
    else:
        h = jnp.dot(pooled, w1t, preferred_element_type=jnp.float32) + b1
        h = jnp.maximum(h, 0.0)
        a = jnp.dot(h, w2t, preferred_element_type=jnp.float32) + b2
    return _sigmoid(a)


# ----------------------------------------------------------------------------
# Path A: whole images fit in one VMEM block -> single fused pass.
# ----------------------------------------------------------------------------
def _ca_fused_kernel(x_ref, w1t_ref, b1_ref, w2t_ref, b2_ref, o_ref, *, inv_hw):
    x = x_ref[...]                                            # (nb, C, HW), native dtype
    pooled = jnp.sum(x.astype(jnp.float32), axis=-1) * inv_hw  # f32 mean, (nb, C)
    a = _fc_block(pooled, w1t_ref[...], b1_ref[...], w2t_ref[...], b2_ref[...])
    o_ref[...] = x * a.astype(x.dtype)[:, :, None]


# ----------------------------------------------------------------------------
# Path B: HW-tiled two-phase fallback for images too large for one block.
#   Phase 1: pool over HW tiles (f32 accumulator) + fc/sigmoid at the end.
#   Phase 2: rescale x tile-by-tile with the per-image channel weights.
# ----------------------------------------------------------------------------
def _ca_pool_kernel(x_ref, w1t_ref, b1_ref, w2t_ref, b2_ref, a_ref, *, hw, inv_hw):
    hstep = pl.program_id(1)
    hw_tile = x_ref.shape[-1]

    @pl.when(hstep == 0)
    def _init():
        a_ref[...] = jnp.zeros_like(a_ref)

    x = x_ref[...]                                            # (nb, C, hw_tile)
    # HBM is not zero-padded -> mask lanes beyond the true spatial extent.
    col = hstep * hw_tile + jax.lax.broadcasted_iota(jnp.int32, (1, 1, hw_tile), 2)
    xf = jnp.where(col < hw, x.astype(jnp.float32), 0.0)
    a_ref[...] = a_ref[...] + jnp.sum(xf, axis=-1)[None]

    @pl.when(hstep == pl.num_programs(1) - 1)
    def _finalize():
        pooled = a_ref[0] * inv_hw                            # (nb, C) f32 mean
        att = _fc_block(pooled, w1t_ref[...], b1_ref[...], w2t_ref[...], b2_ref[...])
        a_ref[...] = att[None]


def _ca_scale_kernel(a_ref, x_ref, o_ref):
    x = x_ref[...]                                            # (nb, C, hw_tile)
    a = a_ref[0]                                              # (nb, C) f32
    o_ref[...] = x * a.astype(x.dtype)[:, :, None]


# ----------------------------------------------------------------------------
# Wrapper
# ----------------------------------------------------------------------------
@functools.partial(jax.jit, static_argnames=("force_hw_tiling",))
def ca_module(x, w1, b1, w2, b2, force_hw_tiling=False):
    """x: (N, C, H, W). w1: (Cr, C), b1: (Cr,), w2: (C, Cr), b2: (C,)."""
    N, C, H, W = x.shape
    Cr = w1.shape[0]
    HW = H * W
    dtype = x.dtype
    itemsize = jnp.dtype(dtype).itemsize
    inv_hw = 1.0 / HW

    # Contiguous reshape only — no pad / astype passes through HBM.
    x3 = x.reshape(N, C, HW)

    # Pre-transpose the tiny 1x1-conv weights (negligible HBM traffic).
    w1t = w1.astype(jnp.float32).T            # (C, Cr)
    w2t = w2.astype(jnp.float32).T            # (Cr, C)
    b1r = b1.astype(jnp.float32).reshape(1, Cr)
    b2r = b2.astype(jnp.float32).reshape(1, C)

    vmem_cap = _vmem_capacity_bytes()
    multi_tc = vmem_cap < 100 * 2**20          # 64 MiB/TC parts (v7x) have 2 TCs
    target_block_bytes = max(vmem_cap // 8, 2 * 2**20)
    if force_hw_tiling:                        # test hook: force the tiled path
        target_block_bytes = min(target_block_bytes, C * 128 * itemsize)

    bytes_per_image = C * HW * itemsize

    weight_specs = [
        pl.BlockSpec((C, Cr), lambda *_: (0, 0)),
        pl.BlockSpec((1, Cr), lambda *_: (0, 0)),
        pl.BlockSpec((Cr, C), lambda *_: (0, 0)),
        pl.BlockSpec((1, C), lambda *_: (0, 0)),
    ]

    if bytes_per_image <= target_block_bytes and not force_hw_tiling:
        # ---- Path A: fused single pass, several images per grid step.
        nb = max(1, min(N, target_block_bytes // bytes_per_image))
        steps = _cdiv(N, nb)
        if multi_tc and N >= 2 and steps < 2:
            nb = _cdiv(N, 2)                   # give both v7x TensorCores work
            steps = _cdiv(N, nb)
        block_bytes = nb * bytes_per_image
        vmem_limit = int(max(32 * 2**20,
                             min(vmem_cap - 4 * 2**20,
                                 4 * block_bytes + 4 * 2**20)))

        out3 = pl.pallas_call(
            functools.partial(_ca_fused_kernel, inv_hw=inv_hw),
            out_shape=jax.ShapeDtypeStruct((N, C, HW), dtype),
            grid_spec=pltpu.PrefetchScalarGridSpec(
                num_scalar_prefetch=0,
                grid=(steps,),
                in_specs=[pl.BlockSpec((nb, C, HW), lambda b: (b, 0, 0))]
                         + weight_specs,
                out_specs=pl.BlockSpec((nb, C, HW), lambda b: (b, 0, 0)),
            ),
            compiler_params=pltpu.CompilerParams(
                dimension_semantics=("parallel",),
                vmem_limit_bytes=vmem_limit,
            ),
        )(x3, w1t, b1r, w2t, b2r)
        return out3.reshape(N, C, H, W)

    # ---- Path B: HW-tiled two-phase path (large images or forced).
    nb = 1
    batch_steps = N
    hw_tile = max(128, (target_block_bytes // max(1, C * itemsize)) // 128 * 128)
    if HW >= 128:
        hw_tile = min(hw_tile, (HW // 128) * 128)
    else:
        hw_tile = HW
    hw_steps = _cdiv(HW, hw_tile)
    block_bytes = nb * C * hw_tile * itemsize
    vmem_limit = int(max(32 * 2**20,
                         min(vmem_cap - 4 * 2**20,
                             4 * block_bytes + 8 * 2**20)))

    x_spec = pl.BlockSpec((nb, C, hw_tile), lambda b, h: (b, 0, h))
    a_spec = pl.BlockSpec((1, nb, C), lambda b, h: (b, 0, 0))

    att = pl.pallas_call(
        functools.partial(_ca_pool_kernel, hw=HW, inv_hw=inv_hw),
        out_shape=jax.ShapeDtypeStruct((batch_steps, nb, C), jnp.float32),
        grid_spec=pltpu.PrefetchScalarGridSpec(
            num_scalar_prefetch=0,
            grid=(batch_steps, hw_steps),
            in_specs=[x_spec] + weight_specs,
            out_specs=a_spec,
        ),
        compiler_params=pltpu.CompilerParams(
            dimension_semantics=("parallel", "arbitrary"),
            vmem_limit_bytes=vmem_limit,
        ),
    )(x3, w1t, b1r, w2t, b2r)

    out3 = pl.pallas_call(
        _ca_scale_kernel,
        out_shape=jax.ShapeDtypeStruct((N, C, HW), dtype),
        grid_spec=pltpu.PrefetchScalarGridSpec(
            num_scalar_prefetch=0,
            grid=(batch_steps, hw_steps),
            in_specs=[a_spec, x_spec],
            out_specs=x_spec,
        ),
        compiler_params=pltpu.CompilerParams(
            dimension_semantics=("parallel", "parallel"),
            vmem_limit_bytes=vmem_limit,
        ),
    )(att, x3)
    return out3.reshape(N, C, H, W)


def ca_reference(x, w1, b1, w2, b2):
    """Pure-JAX reference mirroring the PyTorch forward."""
    pooled = jnp.mean(x, axis=(2, 3), keepdims=True)              # (N, C, 1, 1)
    h = jnp.einsum('nchw,oc->nohw', pooled, w1) + b1[None, :, None, None]
    h = jnp.maximum(h, 0.0)
    a = jnp.einsum('nchw,oc->nohw', h, w2) + b2[None, :, None, None]
    a = jax.nn.sigmoid(a)
    return x * a


if __name__ == "__main__":
    # Small shapes consistent with the module: channels=4, reduction=1.
    N, C, H, W = 2, 4, 16, 16
    reduction = 1
    Cr = C // reduction

    key = jax.random.PRNGKey(0)
    kx, k1, k2, k3, k4 = jax.random.split(key, 5)

    x = jax.random.normal(kx, (N, C, H, W), dtype=jnp.float32)
    w1 = 0.1 * jax.random.normal(k1, (Cr, C), dtype=jnp.float32)
    b1 = 0.1 * jax.random.normal(k2, (Cr,), dtype=jnp.float32)
    w2 = 0.1 * jax.random.normal(k3, (C, Cr), dtype=jnp.float32)
    b2 = 0.1 * jax.random.normal(k4, (C,), dtype=jnp.float32)

    # Path A (fused single pass).
    out = jax.block_until_ready(ca_module(x, w1, b1, w2, b2))
    ref = jax.block_until_ready(ca_reference(x, w1, b1, w2, b2))
    assert out.shape == (N, C, H, W)
    assert jnp.allclose(out, ref, atol=1e-5, rtol=1e-5)

    # Path B (HW-tiled two-phase fallback) exercised with a non-128-multiple
    # spatial extent so the in-kernel spatial mask is tested.
    N2, H2, W2 = 3, 17, 17
    x2 = jax.random.normal(kx, (N2, C, H2, W2), dtype=jnp.float32)
    out2 = jax.block_until_ready(
        ca_module(x2, w1, b1, w2, b2, force_hw_tiling=True))
    ref2 = jax.block_until_ready(ca_reference(x2, w1, b1, w2, b2))
    assert out2.shape == (N2, C, H2, W2)
    assert jnp.allclose(out2, ref2, atol=1e-5, rtol=1e-5)

    print("KERNEL_OK")
</pallas_src>

<mosaic_0001>
module attributes {stable_mosaic.version = 11 : i64} {
  func.func @_ca_fused_kernel(%arg0: i32, %arg1: memref<1x4x256xf32, #tpu.memory_space<vmem>>, %arg2: memref<4x4xf32, #tpu.memory_space<vmem>>, %arg3: memref<1x4xf32, #tpu.memory_space<vmem>>, %arg4: memref<4x4xf32, #tpu.memory_space<vmem>>, %arg5: memref<1x4xf32, #tpu.memory_space<vmem>>, %arg6: memref<1x4x256xf32, #tpu.memory_space<vmem>>) attributes {dimension_semantics = [#tpu.dimension_semantics<parallel>], iteration_bounds = array<i64: 2>, scalar_prefetch = 0 : i64, scratch_operands = 0 : i64, tpu.core_type = #tpu.core_type<tc>, window_params = [{transform_indices = @transform_0, window_bounds = array<i64: 1, 4, 256>}, {pipeline_mode = #tpu.pipeline_mode<synchronous>, transform_indices = @transform_1, window_bounds = array<i64: 4, 4>}, {pipeline_mode = #tpu.pipeline_mode<synchronous>, transform_indices = @transform_2, window_bounds = array<i64: 1, 4>}, {pipeline_mode = #tpu.pipeline_mode<synchronous>, transform_indices = @transform_3, window_bounds = array<i64: 4, 4>}, {pipeline_mode = #tpu.pipeline_mode<synchronous>, transform_indices = @transform_4, window_bounds = array<i64: 1, 4>}, {transform_indices = @transform_5, window_bounds = array<i64: 1, 4, 256>}]} {
    %c0 = arith.constant 0 : index
    %c0_0 = arith.constant 0 : index
    %c0_1 = arith.constant 0 : index
    %0 = vector.load %arg1[%c0, %c0_0, %c0_1] : memref<1x4x256xf32, #tpu.memory_space<vmem>>, vector<1x4x256xf32>
    %cst = arith.constant dense<0.000000e+00> : vector<1x4xf32>
    %1 = vector.multi_reduction <add>, %0, %cst [2] : vector<1x4x256xf32> to vector<1x4xf32>
    %cst_2 = arith.constant 3.906250e-03 : f32
    %2 = vector.broadcast %cst_2 : f32 to vector<1x4xf32>
    %3 = arith.mulf %1, %2 : vector<1x4xf32>
    %c0_3 = arith.constant 0 : index
    %c0_4 = arith.constant 0 : index
    %4 = vector.load %arg2[%c0_3, %c0_4] : memref<4x4xf32, #tpu.memory_space<vmem>>, vector<4x4xf32>
    %c0_5 = arith.constant 0 : index
    %c0_6 = arith.constant 0 : index
    %5 = vector.load %arg3[%c0_5, %c0_6] : memref<1x4xf32, #tpu.memory_space<vmem>>, vector<1x4xf32>
    %c0_7 = arith.constant 0 : index
    %c0_8 = arith.constant 0 : index
    %6 = vector.load %arg4[%c0_7, %c0_8] : memref<4x4xf32, #tpu.memory_space<vmem>>, vector<4x4xf32>
    %c0_9 = arith.constant 0 : index
    %c0_10 = arith.constant 0 : index
    %7 = vector.load %arg5[%c0_9, %c0_10] : memref<1x4xf32, #tpu.memory_space<vmem>>, vector<1x4xf32>
    %8 = vector.shape_cast %3 : vector<1x4xf32> to vector<1x4x1xf32>
    %9 = vector.shape_cast %4 : vector<4x4xf32> to vector<1x4x4xf32>
    %10 = vector.broadcast %8 : vector<1x4x1xf32> to vector<1x4x4xf32>
    %11 = arith.mulf %10, %9 : vector<1x4x4xf32>
    %cst_11 = arith.constant dense<0.000000e+00> : vector<1x4xf32>
    %12 = vector.multi_reduction <add>, %11, %cst_11 [1] : vector<1x4x4xf32> to vector<1x4xf32>
    %13 = arith.addf %12, %5 : vector<1x4xf32>
    %cst_12 = arith.constant 0.000000e+00 : f32
    %14 = vector.broadcast %cst_12 : f32 to vector<1x4xf32>
    %15 = arith.maximumf %13, %14 : vector<1x4xf32>
    %16 = vector.shape_cast %15 : vector<1x4xf32> to vector<1x4x1xf32>
    %17 = vector.shape_cast %6 : vector<4x4xf32> to vector<1x4x4xf32>
    %18 = vector.broadcast %16 : vector<1x4x1xf32> to vector<1x4x4xf32>
    %19 = arith.mulf %18, %17 : vector<1x4x4xf32>
    %cst_13 = arith.constant dense<0.000000e+00> : vector<1x4xf32>
    %20 = vector.multi_reduction <add>, %19, %cst_13 [1] : vector<1x4x4xf32> to vector<1x4xf32>
    %21 = arith.addf %20, %7 : vector<1x4xf32>
    %cst_14 = arith.constant 0.000000e+00 : f32
    %22 = vector.broadcast %cst_14 : f32 to vector<1x4xf32>
    %23 = arith.subf %22, %21 : vector<1x4xf32>
    %24 = math.exp %23 : vector<1x4xf32>
    %cst_15 = arith.constant 1.000000e+00 : f32
    %25 = vector.broadcast %cst_15 : f32 to vector<1x4xf32>
    %26 = arith.addf %25, %24 : vector<1x4xf32>
    %cst_16 = arith.constant 1.000000e+00 : f32
    %27 = vector.broadcast %cst_16 : f32 to vector<1x4xf32>
    %28 = arith.divf %27, %26 : vector<1x4xf32>
    %29 = vector.shape_cast %28 : vector<1x4xf32> to vector<1x4x1xf32>
    %30 = vector.broadcast %29 : vector<1x4x1xf32> to vector<1x4x256xf32>
    %31 = arith.mulf %0, %30 : vector<1x4x256xf32>
    %c0_17 = arith.constant 0 : index
    %c0_18 = arith.constant 0 : index
    %c0_19 = arith.constant 0 : index
    %32 = vector.load %arg6[%c0_17, %c0_18, %c0_19] : memref<1x4x256xf32, #tpu.memory_space<vmem>>, vector<1x4x256xf32>
    tpu.vector_store %arg6[%c0_17, %c0_18, %c0_19], %31 {strides = array<i32>} : memref<1x4x256xf32, #tpu.memory_space<vmem>>, vector<1x4x256xf32>,
    return
  }
  func.func @transform_0(%arg0: i32) -> (i32, i32, i32) {
    %c0_i32 = arith.constant 0 : i32
    %c0_i32_0 = arith.constant 0 : i32
    %c0_i32_1 = arith.constant 0 : i32
    return %arg0, %c0_i32, %c0_i32_0 : i32, i32, i32
  }
  func.func @transform_1(%arg0: i32) -> (i32, i32) {
    %c0_i32 = arith.constant 0 : i32
    %c0_i32_0 = arith.constant 0 : i32
    %c0_i32_1 = arith.constant 0 : i32
    return %c0_i32, %c0_i32_0 : i32, i32
  }
  func.func @transform_2(%arg0: i32) -> (i32, i32) {
    %c0_i32 = arith.constant 0 : i32
    %c0_i32_0 = arith.constant 0 : i32
    %c0_i32_1 = arith.constant 0 : i32
    return %c0_i32, %c0_i32_0 : i32, i32
  }
  func.func @transform_3(%arg0: i32) -> (i32, i32) {
    %c0_i32 = arith.constant 0 : i32
    %c0_i32_0 = arith.constant 0 : i32
    %c0_i32_1 = arith.constant 0 : i32
    return %c0_i32, %c0_i32_0 : i32, i32
  }
  func.func @transform_4(%arg0: i32) -> (i32, i32) {
    %c0_i32 = arith.constant 0 : i32
    %c0_i32_0 = arith.constant 0 : i32
    %c0_i32_1 = arith.constant 0 : i32
    return %c0_i32, %c0_i32_0 : i32, i32
  }
  func.func @transform_5(%arg0: i32) -> (i32, i32, i32) {
    %c0_i32 = arith.constant 0 : i32
    %c0_i32_0 = arith.constant 0 : i32
    %c0_i32_1 = arith.constant 0 : i32
    return %arg0, %c0_i32, %c0_i32_0 : i32, i32, i32
  }
}

</mosaic_0001>

<llo_original>
// kernel: ca_module.1
$region0: #{ca_module.1}
  #allocation0 [shape = 'u32[]', space=smem, size = 0x4, offset = 0x4, fixed_abs, tag = 'smem constant byte address 0x4 - core index']
  #allocation1 [shape = 'u32[144,128]{1,0:T(1,128)}', space=vmem, size = 0x12000, scoped, tag = 'internal scratch']
  %s0 = inlined_call_operand.vmem [shape: f32[2,4,256], index: 0, kind: input, shape index: {}]
  %s1 = inlined_call_operand.vmem [shape: f32[4,4], index: 1, kind: input, shape index: {}]
  %s2 = inlined_call_operand.vmem [shape: f32[1,4], index: 2, kind: input, shape index: {}]
  %s3 = inlined_call_operand.vmem [shape: f32[4,4], index: 3, kind: input, shape index: {}]
  %s4 = inlined_call_operand.vmem [shape: f32[1,4], index: 4, kind: input, shape index: {}]
  %s5 = inlined_call_operand.vmem [shape: f32[2,4,256], index: 5, kind: output, shape index: {}]
  %s6 = sld [smem:[#allocation0]]
  $region53: #{ca_module.1} parent=0
    _
  %s8 = ssub.s32 1, %s6
  %s9 = scalar_select 0, %s8, %s6
  loop: start=0, step=1, limit=4
  $region2: #{ca_module.1} parent=0 // loop_pre_header
    _
  $region3: #{ca_module.1} parent=0 // loop_header
    %s11 = sphi 0, %s15
    %p12 = scmp.ge.s32.totalorder %s11, 4
    %s21 = sphi 0, %s23
    %s24 = sphi 0, %s21
    %s25 = sphi 0, %s24
    %s41 = sphi 0, %s25
    %s45 = sphi 0, %s45
    %s47 = sphi 0, %s45
    %s48 = sphi 0, %s47
    %s62 = sphi 0, %s48
    %s66 = sphi 0, %s66
    %s68 = sphi 0, %s66
    %s69 = sphi 0, %s68
    %s83 = sphi 0, %s69
    %s87 = sphi 0, %s87
    %s89 = sphi 0, %s87
    %s90 = sphi 0, %s89
    %s104 = sphi 0, %s90
    %s108 = sphi 0, %s108
    %s110 = sphi 0, %s108
    %s111 = sphi 0, %s110
    %s125 = sphi 0, %s111
    %s131 = sphi 0, %s133
    %s134 = sphi 0, %s131
    %s135 = sphi 0, %s134
    %s151 = sphi 0, %s135
  $region4: #{ca_module.1} parent=0 // loop_header_branch
    %14 = sbr.rel (%p12) target = $region8
  $region5: #{ca_module.1} parent=0 // loop_body
    %s16 = ssub.s32 %s11, 1
    %s17 = ssub.s32 %s11, 2
    %s18 = sadd.s32 %s11, 1
    %s19 = ssub.s32 %s11, %s18
    %p20 = scmp.eq.s32.totalorder %s19, 0
    %s22 = sadd.s32 %s21, 1
    %s23 = scalar_select %p20, %s21, %s22
    %p26 = pneg %p20
    %p27 = scmp.eq.s32.totalorder %s11, 1
    %p28 = por %p26, %p27
    %p29 = scmp.ne.s32.totalorder %s21, %s24
    %p30 = scmp.eq.s32.totalorder %s11, 0
    %p31 = por %p29, %p30
    %p32 = scmp.ne.s32.totalorder %s21, %s24
    %p33 = scmp.eq.s32.totalorder %s16, 1
    %p34 = por %p32, %p33
    %p35 = scmp.ne.s32.totalorder %s24, %s25
    %p36 = scmp.eq.s32.totalorder %s16, 0
    %p37 = por %p35, %p36
    %p38 = scmp.ne.s32.totalorder %s24, %s25
    %p39 = scmp.eq.s32.totalorder %s17, 1
    %p40 = por %p38, %p39
    %p42 = scmp.ne.s32.totalorder %s25, %s41
    %p43 = scmp.eq.s32.totalorder %s17, 0
    %p44 = por %p42, %p43
    %s46 = sadd.s32 %s45, 1
    %p49 = scmp.eq.s32.totalorder %s11, 1
    %p50 = scmp.ne.s32.totalorder %s45, %s47
    %p51 = scmp.eq.s32.totalorder %s11, 0
    %p52 = por %p50, %p51
    %p53 = scmp.ne.s32.totalorder %s45, %s47
    %p54 = scmp.eq.s32.totalorder %s16, 1
    %p55 = por %p53, %p54
    %p56 = scmp.ne.s32.totalorder %s47, %s48
    %p57 = scmp.eq.s32.totalorder %s16, 0
    %p58 = por %p56, %p57
    %p59 = scmp.ne.s32.totalorder %s47, %s48
    %p60 = scmp.eq.s32.totalorder %s17, 1
    %p61 = por %p59, %p60
    %p63 = scmp.ne.s32.totalorder %s48, %s62
    %p64 = scmp.eq.s32.totalorder %s17, 0
    %p65 = por %p63, %p64
    %s67 = sadd.s32 %s66, 1
    %p70 = scmp.eq.s32.totalorder %s11, 1
    %p71 = scmp.ne.s32.totalorder %s66, %s68
    %p72 = scmp.eq.s32.totalorder %s11, 0
    %p73 = por %p71, %p72
    %p74 = scmp.ne.s32.totalorder %s66, %s68
    %p75 = scmp.eq.s32.totalorder %s16, 1
    %p76 = por %p74, %p75
    %p77 = scmp.ne.s32.totalorder %s68, %s69
    %p78 = scmp.eq.s32.totalorder %s16, 0
    %p79 = por %p77, %p78
    %p80 = scmp.ne.s32.totalorder %s68, %s69
    %p81 = scmp.eq.s32.totalorder %s17, 1
    %p82 = por %p80, %p81
    %p84 = scmp.ne.s32.totalorder %s69, %s83
    %p85 = scmp.eq.s32.totalorder %s17, 0
    %p86 = por %p84, %p85
    %s88 = sadd.s32 %s87, 1
    %p91 = scmp.eq.s32.totalorder %s11, 1
    %p92 = scmp.ne.s32.totalorder %s87, %s89
    %p93 = scmp.eq.s32.totalorder %s11, 0
    %p94 = por %p92, %p93
    %p95 = scmp.ne.s32.totalorder %s87, %s89
    %p96 = scmp.eq.s32.totalorder %s16, 1
    %p97 = por %p95, %p96
    %p98 = scmp.ne.s32.totalorder %s89, %s90
    %p99 = scmp.eq.s32.totalorder %s16, 0
    %p100 = por %p98, %p99
    %p101 = scmp.ne.s32.totalorder %s89, %s90
    %p102 = scmp.eq.s32.totalorder %s17, 1
    %p103 = por %p101, %p102
    %p105 = scmp.ne.s32.totalorder %s90, %s104
    %p106 = scmp.eq.s32.totalorder %s17, 0
    %p107 = por %p105, %p106
    %s109 = sadd.s32 %s108, 1
    %p112 = scmp.eq.s32.totalorder %s11, 1
    %p113 = scmp.ne.s32.totalorder %s108, %s110
    %p114 = scmp.eq.s32.totalorder %s11, 0
    %p115 = por %p113, %p114
    %p116 = scmp.ne.s32.totalorder %s108, %s110
    %p117 = scmp.eq.s32.totalorder %s16, 1
    %p118 = por %p116, %p117
    %p119 = scmp.ne.s32.totalorder %s110, %s111
    %p120 = scmp.eq.s32.totalorder %s16, 0
    %p121 = por %p119, %p120
    %p122 = scmp.ne.s32.totalorder %s110, %s111
    %p123 = scmp.eq.s32.totalorder %s17, 1
    %p124 = por %p122, %p123
    %p126 = scmp.ne.s32.totalorder %s111, %s125
    %p127 = scmp.eq.s32.totalorder %s17, 0
    %p128 = por %p126, %p127
    %s129 = ssub.s32 %s11, %s18
    %p130 = scmp.eq.s32.totalorder %s129, 0
    %s132 = sadd.s32 %s131, 1
    %s133 = scalar_select %p130, %s131, %s132
    %p136 = pneg %p130
    %p137 = scmp.eq.s32.totalorder %s11, 1
    %p138 = por %p136, %p137
    %p139 = scmp.ne.s32.totalorder %s131, %s134
    %p140 = scmp.eq.s32.totalorder %s11, 0
    %p141 = por %p139, %p140
    %p142 = scmp.ne.s32.totalorder %s131, %s134
    %p143 = scmp.eq.s32.totalorder %s16, 1
    %p144 = por %p142, %p143
    %p145 = scmp.ne.s32.totalorder %s134, %s135
    %p146 = scmp.eq.s32.totalorder %s16, 0
    %p147 = por %p145, %p146
    %p148 = scmp.ne.s32.totalorder %s134, %s135
    %p149 = scmp.eq.s32.totalorder %s17, 1
    %p150 = por %p148, %p149
    %p152 = scmp.ne.s32.totalorder %s135, %s151
    %p153 = scmp.eq.s32.totalorder %s17, 0
    %p154 = por %p152, %p153
    %p155 = scmp.le.s32.totalorder 1, %s11
    %p156 = scmp.lt.s32.totalorder %s11, 3
    %p157 = pnand %p155, %p156
    %p158 = pneg %p157
    // Predicated region
    $region9: #{ca_module.1} parent=5 // pred_check
      _
    $region10: #{ca_module.1} parent=5 // pred_check_branch
      %160 = sbr.rel (%p157) target = $region12
    $region11: #{ca_module.1} parent=5 // pred_region
      %s161 = ssub.s32 %s11, 1
      // Predicated region
      $region13: #{ca_module.1} parent=11 // pred_check
        %p162 = pneg %p58
      $region14: #{ca_module.1} parent=11 // pred_check_branch
        %164 = sbr.rel (%p162) target = $region16
      $region15: #{ca_module.1} parent=11 // pred_region
        _
      $region16: #{ca_module.1} parent=11 // pred_fallthru
        _
      // Predicated region
      $region17: #{ca_module.1} parent=11 // pred_check
        %p165 = pneg %p79
      $region18: #{ca_module.1} parent=11 // pred_check_branch
        %167 = sbr.rel (%p165) target = $region20
      $region19: #{ca_module.1} parent=11 // pred_region
        _
      $region20: #{ca_module.1} parent=11 // pred_fallthru
        _
      // Predicated region
      $region21: #{ca_module.1} parent=11 // pred_check
        %p168 = pneg %p100
      $region22: #{ca_module.1} parent=11 // pred_check_branch
        %170 = sbr.rel (%p168) target = $region24
      $region23: #{ca_module.1} parent=11 // pred_region
        _
      $region24: #{ca_module.1} parent=11 // pred_fallthru
        _
      // Predicated region
      $region25: #{ca_module.1} parent=11 // pred_check
        %p171 = pneg %p121
      $region26: #{ca_module.1} parent=11 // pred_check_branch
        %173 = sbr.rel (%p171) target = $region28
      $region27: #{ca_module.1} parent=11 // pred_region
        _
      $region28: #{ca_module.1} parent=11 // pred_fallthru
        _
    $region12: #{ca_module.1} parent=5 // pred_fallthru
      _
    %p174 = scmp.lt.s32.totalorder %s11, 2
    // Predicated region
    $region29: #{ca_module.1} parent=5 // pred_check
      %p175 = pneg %p174
    $region30: #{ca_module.1} parent=5 // pred_check_branch
      %177 = sbr.rel (%p175) target = $region32
    $region31: #{ca_module.1} parent=5 // pred_region
      // Predicated region
      $region33: #{ca_module.1} parent=31 // pred_check
        %p178 = pneg %p31
      $region34: #{ca_module.1} parent=31 // pred_check_branch
        %180 = sbr.rel (%p178) target = $region36
      $region35: #{ca_module.1} parent=31 // pred_region
        %p181 = scmp.lt.s32.totalorder %s11, 1
        %s182 = scalar_select %p181, %s11, 1
        %s183 = smul.addr %s182, 2
        %s184 = smul.addr %s183, 4
        %s185 = scalar_lea.vmem %s0, %s184
      $region36: #{ca_module.1} parent=31 // pred_fallthru
        _
    $region32: #{ca_module.1} parent=5 // pred_fallthru
      _
    %p186 = scmp.le.s32.totalorder 1, %s11
    %p187 = scmp.lt.s32.totalorder %s11, 3
    %p188 = pnand %p186, %p187
    %p189 = pneg %p188
    // Predicated region
    $region37: #{ca_module.1} parent=5 // pred_check
      _
    $region38: #{ca_module.1} parent=5 // pred_check_branch
      %191 = sbr.rel (%p188) target = $region40
    $region39: #{ca_module.1} parent=5 // pred_region
      %s192 = ssub.s32 %s11, 1
      %p193 = scmp.lt.s32.totalorder %s16, 1
      %s194 = scalar_select %p193, %s16, 1
      %s195 = smul.addr %s194, 2
      %s196 = smul.addr %s195, 4
      %s197 = scalar_lea.vmem %s0, %s196
      %p198 = pneg %p37
      %p199 = pneg %p34
      %p200 = pneg %p58
      %p201 = pneg %p55
      %p202 = pneg %p79
      %p203 = pneg %p76
      %p204 = pneg %p100
      %p205 = pneg %p97
      %p206 = pneg %p121
      %p207 = pneg %p118
      %p208 = pneg %p147
      %p209 = pneg %p144
      %p210 = scmp.lt.s32.totalorder %s16, 1
      %s211 = scalar_select %p210, %s16, 1
      %s212 = smul.addr %s211, 2
      %s213 = smul.addr %s212, 4
      %s214 = scalar_lea.vmem %s5, %s213
      %p215 = scmp.lt.s32.totalorder %s16, 1
      %s216 = scalar_select %p215, %s16, 1
      %s217 = smul.addr %s216, 2
      %s218 = smul.addr %s217, 4
      %s219 = scalar_lea.vmem %s0, %s218
      %p220 = scmp.lt.s32.totalorder %s16, 1
      %s221 = scalar_select %p220, %s16, 1
      %s222 = smul.addr %s221, 2
      %s223 = smul.addr %s222, 4
      %s224 = scalar_lea.vmem %s5, %s223
      %v225 = vld [vmem:[%s219] sm:$0xff]
      %v227 = vcombine.high %v225, %v225
      %vm229 = vcmask 1043456
      %v230 = vsel %vm229, %v225, 0.0
      %v231 = vsel %vm229, %v227, 0.0
      %v232 = vadd.f32 %v230, %v231
      %233 = vadd.xlane.f32.xlu0 %v232
      %v234 = vpop.xlane.xlu0 %233
      %v235 = vmul.f32 %v234, 0.00390625
      %v236 = vld [vmem:[%s1] sm:$0xf]
      %v237 = vld [vmem:[%s2] sm:$0x1]
      %v238 = vld [vmem:[%s3] sm:$0xf]
      %v239 = vld [vmem:[%s4] sm:$0x1]
      %v240 = vmul.f32 %v235, %v236
      %vm241 = vcmask 27648
      %v242 = vsel %vm241, %v240, 0.0
      %v243 = vrot.slane %v242, 4
      %v244 = vadd.f32 %v242, %v243
      %v245 = vrot.slane %v244, 2
      %v246 = vadd.f32 %v244, %v245
      %v247 = vrot.slane %v246, 1
      %v248 = vadd.f32 %v246, %v247
      %v249 = vadd.f32 %v248, %v237
      %v250 = vmax.f32 %v249, 0.0
      %v251 = vlaneseq
      %v252 = vshrl.u32 %v251, 7
      %v253 = vsub.s32 0, %v252
      %v254 = vrot.slane %v250, %v253
      %256 = vbcast.lane.b32.xlu0 %v254, 256
      %v257 = vpop.permute.xlu0 %256
      %v258 = vmul.f32 %v257, %v238
      %v259 = vsel %vm241, %v258, 0.0
      %v260 = vrot.slane %v259, 4
      %v261 = vadd.f32 %v259, %v260
      %v262 = vrot.slane %v261, 2
      %v263 = vadd.f32 %v261, %v262
      %v264 = vrot.slane %v263, 1
      %v265 = vadd.f32 %v263, %v264
      %v266 = vadd.f32 %v265, %v239
      %v267 = vsub.f32 0.0, %v266
      %v268 = vmul.f32 %v267, 1.442695
      %v269 = vpow.pop %v268
      %v270 = vadd.f32 %v269, 1.0
      %v271 = vrcp.pop %v270
      %v272 = vmul.f32 1.0, %v271
      %v273 = vlaneseq
      %v274 = vshrl.u32 %v273, 7
      %v275 = vsub.s32 0, %v274
      %v276 = vrot.slane %v272, %v275
      %278 = vbcast.lane.b32.xlu0 %v276, 256
      %v279 = vpop.permute.xlu0 %278
      %v282 = vunpack.c.l.s4 839922192
      %v283 = vunpack.c.0.s8 %v282
      %v284 = vlaneseq
      %v285 = vshrl.u32 %v284, 7
      %v286 = vsub.s32 %v283, %v285
      %v287 = vrot.slane %v279, %v286
      %v289 = vmul.f32 %v225, %v287
      %290 = vst [vmem:[%s224] sm:$0xff] %v289
      %p291 = scmp.lt.s32.totalorder %s16, 1
      %s292 = scalar_select %p291, %s16, 1
      %s293 = smul.addr %s292, 2
      %s294 = smul.addr %s293, 4
      %s295 = scalar_lea.vmem %s5, %s294
      // Predicated region
      $region41: #{ca_module.1} parent=39 // pred_check
        %p296 = pneg %p144
      $region42: #{ca_module.1} parent=39 // pred_check_branch
        %298 = sbr.rel (%p296) target = $region44
      $region43: #{ca_module.1} parent=39 // pred_region
        _
      $region44: #{ca_module.1} parent=39 // pred_fallthru
        _
    $region40: #{ca_module.1} parent=5 // pred_fallthru
      _
    %p299 = scmp.le.s32.totalorder 2, %s11
    // Predicated region
    $region45: #{ca_module.1} parent=5 // pred_check
      %p300 = pneg %p299
    $region46: #{ca_module.1} parent=5 // pred_check_branch
      %302 = sbr.rel (%p300) target = $region48
    $region47: #{ca_module.1} parent=5 // pred_region
      %s303 = ssub.s32 %s11, 2
      // Predicated region
      $region49: #{ca_module.1} parent=47 // pred_check
        %p304 = pneg %p150
      $region50: #{ca_module.1} parent=47 // pred_check_branch
        %306 = sbr.rel (%p304) target = $region52
      $region51: #{ca_module.1} parent=47 // pred_region
        %p307 = scmp.lt.s32.totalorder %s17, 1
        %s308 = scalar_select %p307, %s17, 1
        %s309 = smul.addr %s308, 2
        %s310 = smul.addr %s309, 4
        %s311 = scalar_lea.vmem %s5, %s310
      $region52: #{ca_module.1} parent=47 // pred_fallthru
        _
    $region48: #{ca_module.1} parent=5 // pred_fallthru
      _
  $region6: #{ca_module.1} parent=0 // loop_footer
    %s15 = sadd.s32 1, %s11
  $region7: #{ca_module.1} parent=0 // loop_footer_branch
    %10 = sbr.rel target = $region3
  $region8: #{ca_module.1} parent=0 // loop_exit
    _

</llo_original>
